<compile_context>
chip_gen: v6e
topology: v6e:2x2x1
jax: 0.10.0
libtpu: 0.0.40
codegen_flags: <defaults>
</compile_context>

<pallas_src>
import jax
import jax.numpy as jnp
from jax.experimental import pallas as pl
from jax.experimental.pallas import tpu as pltpu


def _copy_kernel(x_ref, o_ref):
    # Pure identity copy: same layout in and out, lane-dense last dim.
    # Only vld/vst + DMA — nothing crosses (8,128) vreg tiles.
    o_ref[...] = x_ref[...]


def _pick_tile(dim, align, target):
    """Largest multiple of `align` that divides `dim` and is <= target.
    Falls back to the full extent, which is always a legal block shape."""
    t = min(target, dim)
    t -= t % align
    while t >= align:
        if dim % t == 0:
            return t
        t -= align
    return dim


def _sublane_align(dtype):
    """Packed-sublane alignment: 8 for 32-bit, 16 for 16-bit, 32 for 8-bit."""
    itemsize = jnp.dtype(dtype).itemsize
    return 8 * max(1, 4 // max(1, itemsize))


def _vmem_capacity_bytes():
    try:
        cap = getattr(pltpu.get_tpu_info(), "vmem_capacity_bytes", None)
        if cap:
            return int(cap)
    except Exception:
        pass
    return 64 << 20  # conservative default: v7x per-TensorCore VMEM


def eeg_to_token(x, slice_size, use_pallas=True):
    """x: (B, C, S) -> (B, C * (S // slice_size), slice_size)."""
    assert x.ndim == 3
    B, C, S = x.shape
    assert S % slice_size == 0
    n_slices = C * (S // slice_size)

    # Production fast path: the whole op is a metadata-only reshape.
    if not use_pallas:
        return x.reshape(B, n_slices, slice_size)

    itemsize = jnp.dtype(x.dtype).itemsize
    total = B * C * S

    # Re-view the contiguous buffer as (rows, L): since the kernel is an
    # elementwise identity, any factorization is metadata-only.  A wide L
    # guarantees lane-dense, unmasked stores regardless of S.
    L = None
    for cand in (4096, 2048, 1024, 512, 256, 128):
        if total % cand == 0:
            L = cand
            break
    if L is None:
        # No lane-dense factorization (tiny / odd total): plain reshape wins.
        return x.reshape(B, n_slices, slice_size)
    rows = total // L
    x2d = x.reshape(rows, L)

    # Chip-aware budgets: block ~ VMEM/16 (capped at 8 MiB); scoped-VMEM limit
    # at 3/4 of physical.  in + out double buffers => ~4x block footprint.
    vmem_cap = _vmem_capacity_bytes()
    block_target = max(1 << 20, min(8 << 20, vmem_cap // 16))
    vmem_limit = int(min(vmem_cap * 3 // 4, 96 << 20))

    align = _sublane_align(x.dtype)
    row_target = max(align, block_target // max(1, L * itemsize))
    row_tile = _pick_tile(rows, align, row_target)

    if row_tile * L * itemsize > vmem_limit // 4:
        # Pathological factorization (e.g. huge prime row count): the op is a
        # pure reshape anyway, so fall back rather than blow the VMEM budget.
        return x.reshape(B, n_slices, slice_size)

    # Give v7x's two TensorCores equal work when everything fits one block.
    n_steps = rows // row_tile
    if n_steps == 1 and row_tile % (2 * align) == 0:
        row_tile //= 2
        n_steps = 2

    out2d = pl.pallas_call(
        _copy_kernel,
        out_shape=jax.ShapeDtypeStruct((rows, L), x.dtype),
        grid=(n_steps,),
        in_specs=[pl.BlockSpec((row_tile, L), lambda i: (i, 0))],
        out_specs=pl.BlockSpec((row_tile, L), lambda i: (i, 0)),
        compiler_params=pltpu.CompilerParams(
            # Independent copies -> parallel grid, shardable across v7x's TCs.
            dimension_semantics=("parallel",),
            vmem_limit_bytes=vmem_limit,
        ),
        cost_estimate=pl.CostEstimate(
            flops=0,
            transcendentals=0,
            bytes_accessed=2 * total * itemsize,
        ),
        # TODO(synk): add input_output_aliases={0: 0} when the caller donates x
        # (skipped here because the test reuses x for the reference check).
    )(x2d)

    # Free, metadata-only reshape to the module's output layout.
    return out2d.reshape(B, n_slices, slice_size)


if __name__ == "__main__":
    key = jax.random.PRNGKey(0)

    # Module-consistent small shape: n_channels=4, seq_len=16, slice_size=4, batch=2.
    B, C, S, SLICE = 2, 4, 16, 4
    x = jax.random.normal(key, (B, C, S), dtype=jnp.float32)
    out = jax.block_until_ready(eeg_to_token(x, SLICE))
    ref = x.reshape(B, C * (S // SLICE), SLICE)
    assert out.shape == (B, C * (S // SLICE), SLICE), out.shape
    assert out.dtype == x.dtype
    assert jnp.array_equal(out, ref), "mismatch vs reference (small f32)"

    # Wider bf16 case: exercises the lane-dense (rows, L=4096) re-view and
    # the dtype-aware (16-row) sublane alignment.
    B2, C2, S2, SLICE2 = 2, 8, 512, 8
    x2 = jax.random.normal(jax.random.PRNGKey(0), (B2, C2, S2)).astype(jnp.bfloat16)
    out2 = jax.block_until_ready(eeg_to_token(x2, SLICE2))
    ref2 = x2.reshape(B2, C2 * (S2 // SLICE2), SLICE2)
    assert out2.shape == ref2.shape and out2.dtype == jnp.bfloat16
    assert jnp.array_equal(out2, ref2), "mismatch vs reference (bf16)"

    # Larger f32 case: exercises the multi-step 1-D grid / two-TC split path.
    B3, C3, S3, SLICE3 = 8, 16, 1024, 16
    x3 = jax.random.normal(jax.random.PRNGKey(0), (B3, C3, S3), dtype=jnp.float32)
    out3 = jax.block_until_ready(eeg_to_token(x3, SLICE3))
    ref3 = x3.reshape(B3, C3 * (S3 // SLICE3), SLICE3)
    assert out3.shape == ref3.shape
    assert jnp.array_equal(out3, ref3), "mismatch vs reference (large f32)"

    print("KERNEL_OK")
</pallas_src>

<mosaic_0001>
module attributes {stable_mosaic.version = 11 : i64} {
  func.func @_copy_kernel(%arg0: i32, %arg1: memref<1x128xf32, #tpu.memory_space<vmem>>, %arg2: memref<1x128xf32, #tpu.memory_space<vmem>>) attributes {dimension_semantics = [#tpu.dimension_semantics<parallel>], iteration_bounds = array<i64: 1>, scalar_prefetch = 0 : i64, scratch_operands = 0 : i64, tpu.core_type = #tpu.core_type<tc>, window_params = [{transform_indices = @transform_0, window_bounds = array<i64: 1, 128>}, {transform_indices = @transform_1, window_bounds = array<i64: 1, 128>}]} {
    %c0 = arith.constant 0 : index
    %c0_0 = arith.constant 0 : index
    %0 = vector.load %arg1[%c0, %c0_0] : memref<1x128xf32, #tpu.memory_space<vmem>>, vector<1x128xf32>
    %c0_1 = arith.constant 0 : index
    %c0_2 = arith.constant 0 : index
    %1 = vector.load %arg2[%c0_1, %c0_2] : memref<1x128xf32, #tpu.memory_space<vmem>>, vector<1x128xf32>
    tpu.vector_store %arg2[%c0_1, %c0_2], %0 {strides = array<i32>} : memref<1x128xf32, #tpu.memory_space<vmem>>, vector<1x128xf32>,
    return
  }
  func.func @transform_0(%arg0: i32) -> (i32, i32) {
    %c0_i32 = arith.constant 0 : i32
    %c0_i32_0 = arith.constant 0 : i32
    return %arg0, %c0_i32 : i32, i32
  }
  func.func @transform_1(%arg0: i32) -> (i32, i32) {
    %c0_i32 = arith.constant 0 : i32
    %c0_i32_0 = arith.constant 0 : i32
    return %arg0, %c0_i32 : i32, i32
  }
}

</mosaic_0001>

<llo_original>
// kernel: tpu_custom_call.1
$region0: #{tpu_custom_call.1}
  #allocation0 [shape = 'u32[]', space=smem, size = 0x4, offset = 0x4, fixed_abs, tag = 'smem constant byte address 0x4 - core index']
  #allocation1 [shape = 'u32[144,128]{1,0:T(1,128)}', space=vmem, size = 0x12000, scoped, tag = 'internal scratch']
  %s0 = inlined_call_operand.hbm [shape: f32[1,128], index: 0, kind: input, shape index: {}]
  %s1 = inlined_call_operand.hbm [shape: f32[1,128], index: 1, kind: output, shape index: {}]
  %s2 = sld [smem:[#allocation0]]
  $region18: #{tpu_custom_call.1} parent=0
    _
  %s4 = ssub.s32 1, %s2
  %s5 = scalar_select 0, %s4, %s2
  $region1: #{tpu_custom_call.1} parent=0
    #allocation2 [shape = 'u8[512]{0}', space=vmem, size = 0x400, scoped, tag = 'input window, operand 0, single buffered']
    #allocation3 [shape = 's32[1]{0}', space=sflag, size = 0x4, scoped, tag = 'scoped memory for tpu_custom_call.1']
    #allocation4 [shape = 's32[1]{0}', space=sflag, size = 0x4, scoped, tag = 'scoped memory for tpu_custom_call.1']
    #allocation5 [shape = 'u8[512]{0}', space=vmem, size = 0x400, scoped, tag = 'output window, operand 0, single buffered']
    %6 = vsyncpa [#allocation3], 0
    %7 = vsyncpa [#allocation4], 0
    // Predicated region
    $region2: #{tpu_custom_call.1} parent=1 // pred_check
      _
    $region3: #{tpu_custom_call.1} parent=1 // pred_check_branch
      %9 = sbr.rel (0) target = $region5
    $region4: #{tpu_custom_call.1} parent=1 // pred_region
      %s11 = ssub.s32 16, 16
      %12 = vsyncadd [#allocation3], %s11
      %s14 = sshll.u32 [#allocation2], 4
      %s15 = int_to_ptr.vmem [resolvable:$true] %s14
      %17 = dma.hbm_to_vmem [thread:$0]  %s0, 16, %s15, [#allocation3]
    $region5: #{tpu_custom_call.1} parent=1 // pred_fallthru
      _
    // Predicated region
    $region6: #{tpu_custom_call.1} parent=1 // pred_check
      _
    $region7: #{tpu_custom_call.1} parent=1 // pred_check_branch
      %19 = sbr.rel (0) target = $region9
    $region8: #{tpu_custom_call.1} parent=1 // pred_region
      %20 = dma.done [#allocation3], 16
    $region9: #{tpu_custom_call.1} parent=1 // pred_fallthru
      _
    %v21 = vld [vmem:[#allocation2] sm:$0x1]
    %22 = vst [vmem:[#allocation5] sm:$0x1] %v21
    // Predicated region
    $region10: #{tpu_custom_call.1} parent=1 // pred_check
      _
    $region11: #{tpu_custom_call.1} parent=1 // pred_check_branch
      %24 = sbr.rel (0) target = $region13
    $region12: #{tpu_custom_call.1} parent=1 // pred_region
      %s26 = ssub.s32 16, 16
      %27 = vsyncadd [#allocation4], %s26
      %s29 = sshll.u32 [#allocation5], 4
      %s30 = int_to_ptr.vmem [resolvable:$true] %s29
      %32 = dma.vmem_to_hbm [thread:$0]  %s30, 16, %s1, [#allocation4]
    $region13: #{tpu_custom_call.1} parent=1 // pred_fallthru
      _
    // Predicated region
    $region14: #{tpu_custom_call.1} parent=1 // pred_check
      _
    $region15: #{tpu_custom_call.1} parent=1 // pred_check_branch
      %34 = sbr.rel (0) target = $region17
    $region16: #{tpu_custom_call.1} parent=1 // pred_region
      %35 = dma.done [#allocation4], 16
    $region17: #{tpu_custom_call.1} parent=1 // pred_fallthru
      _
    %36 = vsyncpa [#allocation3], 1
    %37 = vsyncpa [#allocation4], 1

</llo_original>
